<compile_context>
chip_gen: v5e
topology: v5e:2x2
jax: 0.10.0
libtpu: 0.0.40
codegen_flags: <defaults>
</compile_context>

<pallas_src>
import jax
import jax.numpy as jnp
from jax.experimental import pallas as pl
from jax.experimental.pallas import tpu as pltpu


def conv1x1_sub_relu_kernel(x_ref, w_ref, b_ref, o_ref):
    # x_ref: VMEM (Cin, TM)   w_ref: SMEM (Cout, Cin)
    # b_ref: SMEM (Cout,)     o_ref: VMEM (Cout, TM)
    cin = x_ref.shape[0]
    cout = o_ref.shape[0]
    x = x_ref[...]                                    # (Cin, TM) f32, lane-dense
    rows = []
    for c in range(cout):                             # fully unrolled VPU contraction
        acc = x[0:1, :] * w_ref[c, 0]
        for k in range(1, cin):
            acc = acc + x[k:k + 1, :] * w_ref[c, k]
        rows.append(acc + b_ref[c])                   # bias already includes the -299
    out = jnp.concatenate(rows, axis=0)               # (Cout, TM)
    o_ref[...] = jnp.maximum(out, 0.0).astype(o_ref.dtype)


def model_forward(x_nchw, weight, bias, *, m_tile=512):
    """x_nchw: (N, Cin, H, W); weight: (Cout, Cin, 1, 1); bias: (Cout,).
    Returns (N, H, W, Cout) float32 == relu(permute_NHWC(conv1x1(x)) - 299)."""
    N, Cin, H, W = x_nchw.shape
    Cout = weight.shape[0]
    HW = H * W

    # Channels-first, spatial-flattened view -> no input transpose pass.
    x_mat = x_nchw.reshape(N, Cin, HW)
    w_mat = weight[:, :, 0, 0]                        # (Cout, Cin) -> SMEM scalars
    b_fold = (bias - 299.0).astype(jnp.float32)       # fold the constant into the bias

    # Tile the spatial axis only when it divides into 128-lane-aligned chunks;
    # otherwise use the full extent (allowed since block dim == full array dim).
    if HW >= m_tile and HW % m_tile == 0:
        tm = m_tile
    else:
        tm = HW
    num_m = HW // tm

    out_cm = pl.pallas_call(
        conv1x1_sub_relu_kernel,
        out_shape=jax.ShapeDtypeStruct((N, Cout, HW), jnp.float32),
        grid=(N, num_m),
        in_specs=[
            pl.BlockSpec((None, Cin, tm), lambda n, m: (n, 0, m)),
            pl.BlockSpec(memory_space=pltpu.MemorySpace.SMEM),
            pl.BlockSpec(memory_space=pltpu.MemorySpace.SMEM),
        ],
        out_specs=pl.BlockSpec((None, Cout, tm), lambda n, m: (n, 0, m)),
        compiler_params=pltpu.CompilerParams(
            dimension_semantics=("parallel", "parallel"),
        ),
    )(x_mat, w_mat, b_fold)

    # Tiny output-side permute (Cout is only 3 wide) -> NHWC.
    return jnp.transpose(out_cm.reshape(N, Cout, H, W), (0, 2, 3, 1))


if __name__ == "__main__":
    key = jax.random.PRNGKey(0)
    kx, kw, kb = jax.random.split(key, 3)

    # Shapes implied by the module: x1 = randn(1, 12, 10, 10), Conv2d(12, 3, 1)
    N, Cin, H, W, Cout = 1, 12, 10, 10, 3
    x1 = jax.random.normal(kx, (N, Cin, H, W), dtype=jnp.float32)

    # Deterministic parameter init (uniform, like PyTorch's default bound = 1/sqrt(fan_in))
    bound = 1.0 / (Cin ** 0.5)
    weight = jax.random.uniform(kw, (Cout, Cin, 1, 1), jnp.float32, -bound, bound)
    bias = jax.random.uniform(kb, (Cout,), jnp.float32, -bound, bound)

    out = model_forward(x1, weight, bias)
    jax.block_until_ready(out)

    # Reference: 1x1 conv + bias, permute to NHWC, -299, relu.
    ref = jnp.einsum('nchw,oc->nhwo', x1, weight[:, :, 0, 0]) + bias
    ref = jnp.maximum(ref - 299.0, 0.0)

    assert out.shape == (N, H, W, Cout), out.shape
    assert jnp.allclose(out, ref, atol=1e-4, rtol=1e-4), float(jnp.max(jnp.abs(out - ref)))
    print("KERNEL_OK")
</pallas_src>

<mosaic_0001>
module attributes {stable_mosaic.version = 11 : i64} {
  func.func @conv1x1_sub_relu_kernel(%arg0: i32, %arg1: i32, %arg2: memref<1x12x100xf32, #tpu.memory_space<vmem>>, %arg3: memref<3x12xf32, #tpu.memory_space<smem>>, %arg4: memref<3xf32, #tpu.memory_space<smem>>, %arg5: memref<1x3x100xf32, #tpu.memory_space<vmem>>) attributes {dimension_semantics = [#tpu.dimension_semantics<parallel>, #tpu.dimension_semantics<parallel>], iteration_bounds = array<i64: 1, 1>, scalar_prefetch = 0 : i64, scratch_operands = 0 : i64, tpu.core_type = #tpu.core_type<tc>, window_params = [{transform_indices = @transform_0, window_bounds = array<i64: 1, 12, 100>}, {transform_indices = @transform_1, window_bounds = array<i64: 3, 12>}, {transform_indices = @transform_2, window_bounds = array<i64: 3>}, {transform_indices = @transform_3, window_bounds = array<i64: 1, 3, 100>}]} {
    %c0 = arith.constant 0 : index
    %c0_0 = arith.constant 0 : index
    %c0_1 = arith.constant 0 : index
    %0 = vector.load %arg2[%c0, %c0_0, %c0_1] : memref<1x12x100xf32, #tpu.memory_space<vmem>>, vector<1x12x100xf32>
    %1 = vector.shape_cast %0 : vector<1x12x100xf32> to vector<12x100xf32>
    %2 = vector.extract_strided_slice %1 {offsets = [0, 0], sizes = [1, 100], strides = [1, 1]} : vector<12x100xf32> to vector<1x100xf32>
    %c0_2 = arith.constant 0 : index
    %c0_3 = arith.constant 0 : index
    %3 = memref.load %arg3[%c0_2, %c0_3] : memref<3x12xf32, #tpu.memory_space<smem>>
    %4 = vector.broadcast %3 : f32 to vector<1x100xf32>
    %5 = arith.mulf %2, %4 : vector<1x100xf32>
    %6 = vector.extract_strided_slice %1 {offsets = [1, 0], sizes = [1, 100], strides = [1, 1]} : vector<12x100xf32> to vector<1x100xf32>
    %c0_4 = arith.constant 0 : index
    %c1 = arith.constant 1 : index
    %7 = memref.load %arg3[%c0_4, %c1] : memref<3x12xf32, #tpu.memory_space<smem>>
    %8 = vector.broadcast %7 : f32 to vector<1x100xf32>
    %9 = arith.mulf %6, %8 : vector<1x100xf32>
    %10 = arith.addf %5, %9 : vector<1x100xf32>
    %11 = vector.extract_strided_slice %1 {offsets = [2, 0], sizes = [1, 100], strides = [1, 1]} : vector<12x100xf32> to vector<1x100xf32>
    %c0_5 = arith.constant 0 : index
    %c2 = arith.constant 2 : index
    %12 = memref.load %arg3[%c0_5, %c2] : memref<3x12xf32, #tpu.memory_space<smem>>
    %13 = vector.broadcast %12 : f32 to vector<1x100xf32>
    %14 = arith.mulf %11, %13 : vector<1x100xf32>
    %15 = arith.addf %10, %14 : vector<1x100xf32>
    %16 = vector.extract_strided_slice %1 {offsets = [3, 0], sizes = [1, 100], strides = [1, 1]} : vector<12x100xf32> to vector<1x100xf32>
    %c0_6 = arith.constant 0 : index
    %c3 = arith.constant 3 : index
    %17 = memref.load %arg3[%c0_6, %c3] : memref<3x12xf32, #tpu.memory_space<smem>>
    %18 = vector.broadcast %17 : f32 to vector<1x100xf32>
    %19 = arith.mulf %16, %18 : vector<1x100xf32>
    %20 = arith.addf %15, %19 : vector<1x100xf32>
    %21 = vector.extract_strided_slice %1 {offsets = [4, 0], sizes = [1, 100], strides = [1, 1]} : vector<12x100xf32> to vector<1x100xf32>
    %c0_7 = arith.constant 0 : index
    %c4 = arith.constant 4 : index
    %22 = memref.load %arg3[%c0_7, %c4] : memref<3x12xf32, #tpu.memory_space<smem>>
    %23 = vector.broadcast %22 : f32 to vector<1x100xf32>
    %24 = arith.mulf %21, %23 : vector<1x100xf32>
    %25 = arith.addf %20, %24 : vector<1x100xf32>
    %26 = vector.extract_strided_slice %1 {offsets = [5, 0], sizes = [1, 100], strides = [1, 1]} : vector<12x100xf32> to vector<1x100xf32>
    %c0_8 = arith.constant 0 : index
    %c5 = arith.constant 5 : index
    %27 = memref.load %arg3[%c0_8, %c5] : memref<3x12xf32, #tpu.memory_space<smem>>
    %28 = vector.broadcast %27 : f32 to vector<1x100xf32>
    %29 = arith.mulf %26, %28 : vector<1x100xf32>
    %30 = arith.addf %25, %29 : vector<1x100xf32>
    %31 = vector.extract_strided_slice %1 {offsets = [6, 0], sizes = [1, 100], strides = [1, 1]} : vector<12x100xf32> to vector<1x100xf32>
    %c0_9 = arith.constant 0 : index
    %c6 = arith.constant 6 : index
    %32 = memref.load %arg3[%c0_9, %c6] : memref<3x12xf32, #tpu.memory_space<smem>>
    %33 = vector.broadcast %32 : f32 to vector<1x100xf32>
    %34 = arith.mulf %31, %33 : vector<1x100xf32>
    %35 = arith.addf %30, %34 : vector<1x100xf32>
    %36 = vector.extract_strided_slice %1 {offsets = [7, 0], sizes = [1, 100], strides = [1, 1]} : vector<12x100xf32> to vector<1x100xf32>
    %c0_10 = arith.constant 0 : index
    %c7 = arith.constant 7 : index
    %37 = memref.load %arg3[%c0_10, %c7] : memref<3x12xf32, #tpu.memory_space<smem>>
    %38 = vector.broadcast %37 : f32 to vector<1x100xf32>
    %39 = arith.mulf %36, %38 : vector<1x100xf32>
    %40 = arith.addf %35, %39 : vector<1x100xf32>
    %41 = vector.extract_strided_slice %1 {offsets = [8, 0], sizes = [1, 100], strides = [1, 1]} : vector<12x100xf32> to vector<1x100xf32>
    %c0_11 = arith.constant 0 : index
    %c8 = arith.constant 8 : index
    %42 = memref.load %arg3[%c0_11, %c8] : memref<3x12xf32, #tpu.memory_space<smem>>
    %43 = vector.broadcast %42 : f32 to vector<1x100xf32>
    %44 = arith.mulf %41, %43 : vector<1x100xf32>
    %45 = arith.addf %40, %44 : vector<1x100xf32>
    %46 = vector.extract_strided_slice %1 {offsets = [9, 0], sizes = [1, 100], strides = [1, 1]} : vector<12x100xf32> to vector<1x100xf32>
    %c0_12 = arith.constant 0 : index
    %c9 = arith.constant 9 : index
    %47 = memref.load %arg3[%c0_12, %c9] : memref<3x12xf32, #tpu.memory_space<smem>>
    %48 = vector.broadcast %47 : f32 to vector<1x100xf32>
    %49 = arith.mulf %46, %48 : vector<1x100xf32>
    %50 = arith.addf %45, %49 : vector<1x100xf32>
    %51 = vector.extract_strided_slice %1 {offsets = [10, 0], sizes = [1, 100], strides = [1, 1]} : vector<12x100xf32> to vector<1x100xf32>
    %c0_13 = arith.constant 0 : index
    %c10 = arith.constant 10 : index
    %52 = memref.load %arg3[%c0_13, %c10] : memref<3x12xf32, #tpu.memory_space<smem>>
    %53 = vector.broadcast %52 : f32 to vector<1x100xf32>
    %54 = arith.mulf %51, %53 : vector<1x100xf32>
    %55 = arith.addf %50, %54 : vector<1x100xf32>
    %56 = vector.extract_strided_slice %1 {offsets = [11, 0], sizes = [1, 100], strides = [1, 1]} : vector<12x100xf32> to vector<1x100xf32>
    %c0_14 = arith.constant 0 : index
    %c11 = arith.constant 11 : index
    %57 = memref.load %arg3[%c0_14, %c11] : memref<3x12xf32, #tpu.memory_space<smem>>
    %58 = vector.broadcast %57 : f32 to vector<1x100xf32>
    %59 = arith.mulf %56, %58 : vector<1x100xf32>
    %60 = arith.addf %55, %59 : vector<1x100xf32>
    %c0_15 = arith.constant 0 : index
    %61 = memref.load %arg4[%c0_15] : memref<3xf32, #tpu.memory_space<smem>>
    %62 = vector.broadcast %61 : f32 to vector<1x100xf32>
    %63 = arith.addf %60, %62 : vector<1x100xf32>
    %64 = vector.extract_strided_slice %1 {offsets = [0, 0], sizes = [1, 100], strides = [1, 1]} : vector<12x100xf32> to vector<1x100xf32>
    %c1_16 = arith.constant 1 : index
    %c0_17 = arith.constant 0 : index
    %65 = memref.load %arg3[%c1_16, %c0_17] : memref<3x12xf32, #tpu.memory_space<smem>>
    %66 = vector.broadcast %65 : f32 to vector<1x100xf32>
    %67 = arith.mulf %64, %66 : vector<1x100xf32>
    %68 = vector.extract_strided_slice %1 {offsets = [1, 0], sizes = [1, 100], strides = [1, 1]} : vector<12x100xf32> to vector<1x100xf32>
    %c1_18 = arith.constant 1 : index
    %c1_19 = arith.constant 1 : index
    %69 = memref.load %arg3[%c1_18, %c1_19] : memref<3x12xf32, #tpu.memory_space<smem>>
    %70 = vector.broadcast %69 : f32 to vector<1x100xf32>
    %71 = arith.mulf %68, %70 : vector<1x100xf32>
    %72 = arith.addf %67, %71 : vector<1x100xf32>
    %73 = vector.extract_strided_slice %1 {offsets = [2, 0], sizes = [1, 100], strides = [1, 1]} : vector<12x100xf32> to vector<1x100xf32>
    %c1_20 = arith.constant 1 : index
    %c2_21 = arith.constant 2 : index
    %74 = memref.load %arg3[%c1_20, %c2_21] : memref<3x12xf32, #tpu.memory_space<smem>>
    %75 = vector.broadcast %74 : f32 to vector<1x100xf32>
    %76 = arith.mulf %73, %75 : vector<1x100xf32>
    %77 = arith.addf %72, %76 : vector<1x100xf32>
    %78 = vector.extract_strided_slice %1 {offsets = [3, 0], sizes = [1, 100], strides = [1, 1]} : vector<12x100xf32> to vector<1x100xf32>
    %c1_22 = arith.constant 1 : index
    %c3_23 = arith.constant 3 : index
    %79 = memref.load %arg3[%c1_22, %c3_23] : memref<3x12xf32, #tpu.memory_space<smem>>
    %80 = vector.broadcast %79 : f32 to vector<1x100xf32>
    %81 = arith.mulf %78, %80 : vector<1x100xf32>
    %82 = arith.addf %77, %81 : vector<1x100xf32>
    %83 = vector.extract_strided_slice %1 {offsets = [4, 0], sizes = [1, 100], strides = [1, 1]} : vector<12x100xf32> to vector<1x100xf32>
    %c1_24 = arith.constant 1 : index
    %c4_25 = arith.constant 4 : index
    %84 = memref.load %arg3[%c1_24, %c4_25] : memref<3x12xf32, #tpu.memory_space<smem>>
    %85 = vector.broadcast %84 : f32 to vector<1x100xf32>
    %86 = arith.mulf %83, %85 : vector<1x100xf32>
    %87 = arith.addf %82, %86 : vector<1x100xf32>
    %88 = vector.extract_strided_slice %1 {offsets = [5, 0], sizes = [1, 100], strides = [1, 1]} : vector<12x100xf32> to vector<1x100xf32>
    %c1_26 = arith.constant 1 : index
    %c5_27 = arith.constant 5 : index
    %89 = memref.load %arg3[%c1_26, %c5_27] : memref<3x12xf32, #tpu.memory_space<smem>>
    %90 = vector.broadcast %89 : f32 to vector<1x100xf32>
    %91 = arith.mulf %88, %90 : vector<1x100xf32>
    %92 = arith.addf %87, %91 : vector<1x100xf32>
    %93 = vector.extract_strided_slice %1 {offsets = [6, 0], sizes = [1, 100], strides = [1, 1]} : vector<12x100xf32> to vector<1x100xf32>
    %c1_28 = arith.constant 1 : index
    %c6_29 = arith.constant 6 : index
    %94 = memref.load %arg3[%c1_28, %c6_29] : memref<3x12xf32, #tpu.memory_space<smem>>
    %95 = vector.broadcast %94 : f32 to vector<1x100xf32>
    %96 = arith.mulf %93, %95 : vector<1x100xf32>
    %97 = arith.addf %92, %96 : vector<1x100xf32>
    %98 = vector.extract_strided_slice %1 {offsets = [7, 0], sizes = [1, 100], strides = [1, 1]} : vector<12x100xf32> to vector<1x100xf32>
    %c1_30 = arith.constant 1 : index
    %c7_31 = arith.constant 7 : index
    %99 = memref.load %arg3[%c1_30, %c7_31] : memref<3x12xf32, #tpu.memory_space<smem>>
    %100 = vector.broadcast %99 : f32 to vector<1x100xf32>
    %101 = arith.mulf %98, %100 : vector<1x100xf32>
    %102 = arith.addf %97, %101 : vector<1x100xf32>
    %103 = vector.extract_strided_slice %1 {offsets = [8, 0], sizes = [1, 100], strides = [1, 1]} : vector<12x100xf32> to vector<1x100xf32>
    %c1_32 = arith.constant 1 : index
    %c8_33 = arith.constant 8 : index
    %104 = memref.load %arg3[%c1_32, %c8_33] : memref<3x12xf32, #tpu.memory_space<smem>>
    %105 = vector.broadcast %104 : f32 to vector<1x100xf32>
    %106 = arith.mulf %103, %105 : vector<1x100xf32>
    %107 = arith.addf %102, %106 : vector<1x100xf32>
    %108 = vector.extract_strided_slice %1 {offsets = [9, 0], sizes = [1, 100], strides = [1, 1]} : vector<12x100xf32> to vector<1x100xf32>
    %c1_34 = arith.constant 1 : index
    %c9_35 = arith.constant 9 : index
    %109 = memref.load %arg3[%c1_34, %c9_35] : memref<3x12xf32, #tpu.memory_space<smem>>
    %110 = vector.broadcast %109 : f32 to vector<1x100xf32>
    %111 = arith.mulf %108, %110 : vector<1x100xf32>
    %112 = arith.addf %107, %111 : vector<1x100xf32>
    %113 = vector.extract_strided_slice %1 {offsets = [10, 0], sizes = [1, 100], strides = [1, 1]} : vector<12x100xf32> to vector<1x100xf32>
    %c1_36 = arith.constant 1 : index
    %c10_37 = arith.constant 10 : index
    %114 = memref.load %arg3[%c1_36, %c10_37] : memref<3x12xf32, #tpu.memory_space<smem>>
    %115 = vector.broadcast %114 : f32 to vector<1x100xf32>
    %116 = arith.mulf %113, %115 : vector<1x100xf32>
    %117 = arith.addf %112, %116 : vector<1x100xf32>
    %118 = vector.extract_strided_slice %1 {offsets = [11, 0], sizes = [1, 100], strides = [1, 1]} : vector<12x100xf32> to vector<1x100xf32>
    %c1_38 = arith.constant 1 : index
    %c11_39 = arith.constant 11 : index
    %119 = memref.load %arg3[%c1_38, %c11_39] : memref<3x12xf32, #tpu.memory_space<smem>>
    %120 = vector.broadcast %119 : f32 to vector<1x100xf32>
    %121 = arith.mulf %118, %120 : vector<1x100xf32>
    %122 = arith.addf %117, %121 : vector<1x100xf32>
    %c1_40 = arith.constant 1 : index
    %123 = memref.load %arg4[%c1_40] : memref<3xf32, #tpu.memory_space<smem>>
    %124 = vector.broadcast %123 : f32 to vector<1x100xf32>
    %125 = arith.addf %122, %124 : vector<1x100xf32>
    %126 = vector.extract_strided_slice %1 {offsets = [0, 0], sizes = [1, 100], strides = [1, 1]} : vector<12x100xf32> to vector<1x100xf32>
    %c2_41 = arith.constant 2 : index
    %c0_42 = arith.constant 0 : index
    %127 = memref.load %arg3[%c2_41, %c0_42] : memref<3x12xf32, #tpu.memory_space<smem>>
    %128 = vector.broadcast %127 : f32 to vector<1x100xf32>
    %129 = arith.mulf %126, %128 : vector<1x100xf32>
    %130 = vector.extract_strided_slice %1 {offsets = [1, 0], sizes = [1, 100], strides = [1, 1]} : vector<12x100xf32> to vector<1x100xf32>
    %c2_43 = arith.constant 2 : index
    %c1_44 = arith.constant 1 : index
    %131 = memref.load %arg3[%c2_43, %c1_44] : memref<3x12xf32, #tpu.memory_space<smem>>
    %132 = vector.broadcast %131 : f32 to vector<1x100xf32>
    %133 = arith.mulf %130, %132 : vector<1x100xf32>
    %134 = arith.addf %129, %133 : vector<1x100xf32>
    %135 = vector.extract_strided_slice %1 {offsets = [2, 0], sizes = [1, 100], strides = [1, 1]} : vector<12x100xf32> to vector<1x100xf32>
    %c2_45 = arith.constant 2 : index
    %c2_46 = arith.constant 2 : index
    %136 = memref.load %arg3[%c2_45, %c2_46] : memref<3x12xf32, #tpu.memory_space<smem>>
    %137 = vector.broadcast %136 : f32 to vector<1x100xf32>
    %138 = arith.mulf %135, %137 : vector<1x100xf32>
    %139 = arith.addf %134, %138 : vector<1x100xf32>
    %140 = vector.extract_strided_slice %1 {offsets = [3, 0], sizes = [1, 100], strides = [1, 1]} : vector<12x100xf32> to vector<1x100xf32>
    %c2_47 = arith.constant 2 : index
    %c3_48 = arith.constant 3 : index
    %141 = memref.load %arg3[%c2_47, %c3_48] : memref<3x12xf32, #tpu.memory_space<smem>>
    %142 = vector.broadcast %141 : f32 to vector<1x100xf32>
    %143 = arith.mulf %140, %142 : vector<1x100xf32>
    %144 = arith.addf %139, %143 : vector<1x100xf32>
    %145 = vector.extract_strided_slice %1 {offsets = [4, 0], sizes = [1, 100], strides = [1, 1]} : vector<12x100xf32> to vector<1x100xf32>
    %c2_49 = arith.constant 2 : index
    %c4_50 = arith.constant 4 : index
    %146 = memref.load %arg3[%c2_49, %c4_50] : memref<3x12xf32, #tpu.memory_space<smem>>
    %147 = vector.broadcast %146 : f32 to vector<1x100xf32>
    %148 = arith.mulf %145, %147 : vector<1x100xf32>
    %149 = arith.addf %144, %148 : vector<1x100xf32>
    %150 = vector.extract_strided_slice %1 {offsets = [5, 0], sizes = [1, 100], strides = [1, 1]} : vector<12x100xf32> to vector<1x100xf32>
    %c2_51 = arith.constant 2 : index
    %c5_52 = arith.constant 5 : index
    %151 = memref.load %arg3[%c2_51, %c5_52] : memref<3x12xf32, #tpu.memory_space<smem>>
    %152 = vector.broadcast %151 : f32 to vector<1x100xf32>
    %153 = arith.mulf %150, %152 : vector<1x100xf32>
    %154 = arith.addf %149, %153 : vector<1x100xf32>
    %155 = vector.extract_strided_slice %1 {offsets = [6, 0], sizes = [1, 100], strides = [1, 1]} : vector<12x100xf32> to vector<1x100xf32>
    %c2_53 = arith.constant 2 : index
    %c6_54 = arith.constant 6 : index
    %156 = memref.load %arg3[%c2_53, %c6_54] : memref<3x12xf32, #tpu.memory_space<smem>>
    %157 = vector.broadcast %156 : f32 to vector<1x100xf32>
    %158 = arith.mulf %155, %157 : vector<1x100xf32>
    %159 = arith.addf %154, %158 : vector<1x100xf32>
    %160 = vector.extract_strided_slice %1 {offsets = [7, 0], sizes = [1, 100], strides = [1, 1]} : vector<12x100xf32> to vector<1x100xf32>
    %c2_55 = arith.constant 2 : index
    %c7_56 = arith.constant 7 : index
    %161 = memref.load %arg3[%c2_55, %c7_56] : memref<3x12xf32, #tpu.memory_space<smem>>
    %162 = vector.broadcast %161 : f32 to vector<1x100xf32>
    %163 = arith.mulf %160, %162 : vector<1x100xf32>
    %164 = arith.addf %159, %163 : vector<1x100xf32>
    %165 = vector.extract_strided_slice %1 {offsets = [8, 0], sizes = [1, 100], strides = [1, 1]} : vector<12x100xf32> to vector<1x100xf32>
    %c2_57 = arith.constant 2 : index
    %c8_58 = arith.constant 8 : index
    %166 = memref.load %arg3[%c2_57, %c8_58] : memref<3x12xf32, #tpu.memory_space<smem>>
    %167 = vector.broadcast %166 : f32 to vector<1x100xf32>
    %168 = arith.mulf %165, %167 : vector<1x100xf32>
    %169 = arith.addf %164, %168 : vector<1x100xf32>
    %170 = vector.extract_strided_slice %1 {offsets = [9, 0], sizes = [1, 100], strides = [1, 1]} : vector<12x100xf32> to vector<1x100xf32>
    %c2_59 = arith.constant 2 : index
    %c9_60 = arith.constant 9 : index
    %171 = memref.load %arg3[%c2_59, %c9_60] : memref<3x12xf32, #tpu.memory_space<smem>>
    %172 = vector.broadcast %171 : f32 to vector<1x100xf32>
    %173 = arith.mulf %170, %172 : vector<1x100xf32>
    %174 = arith.addf %169, %173 : vector<1x100xf32>
    %175 = vector.extract_strided_slice %1 {offsets = [10, 0], sizes = [1, 100], strides = [1, 1]} : vector<12x100xf32> to vector<1x100xf32>
    %c2_61 = arith.constant 2 : index
    %c10_62 = arith.constant 10 : index
    %176 = memref.load %arg3[%c2_61, %c10_62] : memref<3x12xf32, #tpu.memory_space<smem>>
    %177 = vector.broadcast %176 : f32 to vector<1x100xf32>
    %178 = arith.mulf %175, %177 : vector<1x100xf32>
    %179 = arith.addf %174, %178 : vector<1x100xf32>
    %180 = vector.extract_strided_slice %1 {offsets = [11, 0], sizes = [1, 100], strides = [1, 1]} : vector<12x100xf32> to vector<1x100xf32>
    %c2_63 = arith.constant 2 : index
    %c11_64 = arith.constant 11 : index
    %181 = memref.load %arg3[%c2_63, %c11_64] : memref<3x12xf32, #tpu.memory_space<smem>>
    %182 = vector.broadcast %181 : f32 to vector<1x100xf32>
    %183 = arith.mulf %180, %182 : vector<1x100xf32>
    %184 = arith.addf %179, %183 : vector<1x100xf32>
    %c2_65 = arith.constant 2 : index
    %185 = memref.load %arg4[%c2_65] : memref<3xf32, #tpu.memory_space<smem>>
    %186 = vector.broadcast %185 : f32 to vector<1x100xf32>
    %187 = arith.addf %184, %186 : vector<1x100xf32>
    %188 = tpu.concatenate %63, %125, %187 in 0 : vector<1x100xf32>, vector<1x100xf32>, vector<1x100xf32> -> vector<3x100xf32>
    %cst = arith.constant 0.000000e+00 : f32
    %189 = vector.broadcast %cst : f32 to vector<3x100xf32>
    %190 = arith.maximumf %188, %189 : vector<3x100xf32>
    %c0_66 = arith.constant 0 : index
    %c0_67 = arith.constant 0 : index
    %c0_68 = arith.constant 0 : index
    %191 = vector.load %arg5[%c0_66, %c0_67, %c0_68] : memref<1x3x100xf32, #tpu.memory_space<vmem>>, vector<1x3x100xf32>
    %192 = vector.shape_cast %191 : vector<1x3x100xf32> to vector<3x100xf32>
    %193 = vector.shape_cast %190 : vector<3x100xf32> to vector<1x3x100xf32>
    tpu.vector_store %arg5[%c0_66, %c0_67, %c0_68], %193 {strides = array<i32>} : memref<1x3x100xf32, #tpu.memory_space<vmem>>, vector<1x3x100xf32>,
    return
  }
  func.func @transform_0(%arg0: i32, %arg1: i32) -> (i32, i32, i32) {
    %c0_i32 = arith.constant 0 : i32
    %c0_i32_0 = arith.constant 0 : i32
    return %arg0, %c0_i32, %arg1 : i32, i32, i32
  }
  func.func @transform_1(%arg0: i32, %arg1: i32) -> (i32, i32) {
    %c0_i32 = arith.constant 0 : i32
    %c0_i32_0 = arith.constant 0 : i32
    %c0_i32_1 = arith.constant 0 : i32
    return %c0_i32, %c0_i32_0 : i32, i32
  }
  func.func @transform_2(%arg0: i32, %arg1: i32) -> i32 {
    %c0_i32 = arith.constant 0 : i32
    %c0_i32_0 = arith.constant 0 : i32
    return %c0_i32 : i32
  }
  func.func @transform_3(%arg0: i32, %arg1: i32) -> (i32, i32, i32) {
    %c0_i32 = arith.constant 0 : i32
    %c0_i32_0 = arith.constant 0 : i32
    return %arg0, %c0_i32, %arg1 : i32, i32, i32
  }
}

</mosaic_0001>

<llo_original>
// kernel: tpu_custom_call.1
$region0: #{tpu_custom_call.1}
  #allocation0 [shape = 'u32[]', space=smem, size = 0x4, offset = 0x4, fixed_abs, tag = 'smem constant byte address 0x4 - core index']
  #allocation1 [shape = 'u32[72,128]{1,0:T(1,128)}', space=vmem, size = 0x9000, scoped, tag = 'internal scratch']
  %s0 = inlined_call_operand.vmem [shape: f32[1,12,100], index: 0, kind: input, shape index: {}]
  %s1 = inlined_call_operand.vmem [shape: f32[3,12], index: 1, kind: input, shape index: {}]
  %s2 = inlined_call_operand.vmem [shape: f32[3], index: 2, kind: input, shape index: {}]
  %s3 = inlined_call_operand.vmem [shape: f32[1,3,100], index: 3, kind: output, shape index: {}]
  %s4 = sld [smem:[#allocation0]]
  $region30: #{tpu_custom_call.1} parent=0
    _
  %s6 = ssub.s32 1, %s4
  %s7 = scalar_select 0, %s6, %s4
  $region1: #{tpu_custom_call.1} parent=0
    #allocation2 [shape = 'u8[2048]{0}', space=smem, size = 0x800, scoped, tag = 'input window, operand 1, single buffered']
    #allocation3 [shape = 's32[1]{0}', space=sflag, size = 0x4, scoped, tag = 'scoped memory for tpu_custom_call.1']
    #allocation4 [shape = 'u8[512]{0}', space=smem, size = 0x200, scoped, tag = 'input window, operand 2, single buffered']
    #allocation5 [shape = 's32[1]{0}', space=sflag, size = 0x4, scoped, tag = 'scoped memory for tpu_custom_call.1']
    %8 = vsyncpa [#allocation3], 0
    %9 = vsyncpa [#allocation5], 0
    // Predicated region
    $region2: #{tpu_custom_call.1} parent=1 // pred_check
      _
    $region3: #{tpu_custom_call.1} parent=1 // pred_check_branch
      %11 = sbr.rel (0) target = $region5
    $region4: #{tpu_custom_call.1} parent=1 // pred_region
      _
    $region5: #{tpu_custom_call.1} parent=1 // pred_fallthru
      _
    // Predicated region
    $region6: #{tpu_custom_call.1} parent=1 // pred_check
      _
    $region7: #{tpu_custom_call.1} parent=1 // pred_check_branch
      %13 = sbr.rel (0) target = $region9
    $region8: #{tpu_custom_call.1} parent=1 // pred_region
      %15 = vsyncadd [#allocation3], 0
      %s17 = sshll.u32 %s1, 4
      %s18 = int_to_ptr.vmem [resolvable:$true] %s17
      %20 = dma.vmem_to_smem %s18, 64, [#allocation2], [#allocation3]
    $region9: #{tpu_custom_call.1} parent=1 // pred_fallthru
      _
    // Predicated region
    $region10: #{tpu_custom_call.1} parent=1 // pred_check
      _
    $region11: #{tpu_custom_call.1} parent=1 // pred_check_branch
      %22 = sbr.rel (0) target = $region13
    $region12: #{tpu_custom_call.1} parent=1 // pred_region
      %24 = vsyncadd [#allocation5], 0
      %s26 = sshll.u32 %s2, 4
      %s27 = int_to_ptr.vmem [resolvable:$true] %s26
      %29 = dma.vmem_to_smem %s27, 16, [#allocation4], [#allocation5]
    $region13: #{tpu_custom_call.1} parent=1 // pred_fallthru
      _
    // Predicated region
    $region14: #{tpu_custom_call.1} parent=1 // pred_check
      _
    $region15: #{tpu_custom_call.1} parent=1 // pred_check_branch
      %31 = sbr.rel (0) target = $region17
    $region16: #{tpu_custom_call.1} parent=1 // pred_region
      %33 = dma.done [#allocation3], 64
    $region17: #{tpu_custom_call.1} parent=1 // pred_fallthru
      _
    // Predicated region
    $region18: #{tpu_custom_call.1} parent=1 // pred_check
      _
    $region19: #{tpu_custom_call.1} parent=1 // pred_check_branch
      %35 = sbr.rel (0) target = $region21
    $region20: #{tpu_custom_call.1} parent=1 // pred_region
      %37 = dma.done [#allocation5], 16
    $region21: #{tpu_custom_call.1} parent=1 // pred_fallthru
      _
    %38 = sfence
    %v39 = vld [vmem:[%s0] sm:$0xff]
    %v40 = vld [vmem:[%s0 + $0x8] sm:$0xf]
    %s41 = sld [smem:[#allocation2]]
    %v42 = vstv %s41
    %v43 = vmul.f32 %v39, %v42
    %s44 = sld [smem:[#allocation2 + $0x1]]
    %v45 = vstv %s44
    %v46 = vmul.f32 %v39, %v45
    %v48 = vrot.slane %v46, 1
    %v50 = vadd.f32 %v43, %v48
    %s51 = sld [smem:[#allocation2 + $0x2]]
    %v52 = vstv %s51
    %v53 = vmul.f32 %v39, %v52
    %v55 = vrot.slane %v53, 2
    %v57 = vadd.f32 %v50, %v55
    %s58 = sld [smem:[#allocation2 + $0x3]]
    %v59 = vstv %s58
    %v60 = vmul.f32 %v39, %v59
    %v62 = vrot.slane %v60, 3
    %v64 = vadd.f32 %v57, %v62
    %s65 = sld [smem:[#allocation2 + $0x4]]
    %v66 = vstv %s65
    %v67 = vmul.f32 %v39, %v66
    %v69 = vrot.slane %v67, 4
    %v71 = vadd.f32 %v64, %v69
    %s72 = sld [smem:[#allocation2 + $0x5]]
    %v73 = vstv %s72
    %v74 = vmul.f32 %v39, %v73
    %v76 = vrot.slane %v74, 5
    %v78 = vadd.f32 %v71, %v76
    %s79 = sld [smem:[#allocation2 + $0x6]]
    %v80 = vstv %s79
    %v81 = vmul.f32 %v39, %v80
    %v83 = vrot.slane %v81, 6
    %v85 = vadd.f32 %v78, %v83
    %s86 = sld [smem:[#allocation2 + $0x7]]
    %v87 = vstv %s86
    %v88 = vmul.f32 %v39, %v87
    %v90 = vrot.slane %v88, 7
    %v92 = vadd.f32 %v85, %v90
    %s93 = sld [smem:[#allocation2 + $0x8]]
    %v94 = vstv %s93
    %v95 = vmul.f32 %v40, %v94
    %v96 = vadd.f32 %v92, %v95
    %s97 = sld [smem:[#allocation2 + $0x9]]
    %v98 = vstv %s97
    %v99 = vmul.f32 %v40, %v98
    %v101 = vrot.slane %v99, 1
    %v103 = vadd.f32 %v96, %v101
    %s104 = sld [smem:[#allocation2 + $0xa]]
    %v105 = vstv %s104
    %v106 = vmul.f32 %v40, %v105
    %v108 = vrot.slane %v106, 2
    %v110 = vadd.f32 %v103, %v108
    %s111 = sld [smem:[#allocation2 + $0xb]]
    %v112 = vstv %s111
    %v113 = vmul.f32 %v40, %v112
    %v115 = vrot.slane %v113, 3
    %v117 = vadd.f32 %v110, %v115
    %s118 = sld [smem:[#allocation4]]
    %v119 = vstv %s118
    %v120 = vadd.f32 %v117, %v119
    %s121 = sld [smem:[#allocation2 + $0x80]]
    %v122 = vstv %s121
    %v123 = vmul.f32 %v39, %v122
    %s124 = sld [smem:[#allocation2 + $0x81]]
    %v125 = vstv %s124
    %v126 = vmul.f32 %v39, %v125
    %v128 = vrot.slane %v126, 1
    %v130 = vadd.f32 %v123, %v128
    %s131 = sld [smem:[#allocation2 + $0x82]]
    %v132 = vstv %s131
    %v133 = vmul.f32 %v39, %v132
    %v135 = vrot.slane %v133, 2
    %v137 = vadd.f32 %v130, %v135
    %s138 = sld [smem:[#allocation2 + $0x83]]
    %v139 = vstv %s138
    %v140 = vmul.f32 %v39, %v139
    %v142 = vrot.slane %v140, 3
    %v144 = vadd.f32 %v137, %v142
    %s145 = sld [smem:[#allocation2 + $0x84]]
    %v146 = vstv %s145
    %v147 = vmul.f32 %v39, %v146
    %v149 = vrot.slane %v147, 4
    %v151 = vadd.f32 %v144, %v149
    %s152 = sld [smem:[#allocation2 + $0x85]]
    %v153 = vstv %s152
    %v154 = vmul.f32 %v39, %v153
    %v156 = vrot.slane %v154, 5
    %v158 = vadd.f32 %v151, %v156
    %s159 = sld [smem:[#allocation2 + $0x86]]
    %v160 = vstv %s159
    %v161 = vmul.f32 %v39, %v160
    %v163 = vrot.slane %v161, 6
    %v165 = vadd.f32 %v158, %v163
    %s166 = sld [smem:[#allocation2 + $0x87]]
    %v167 = vstv %s166
    %v168 = vmul.f32 %v39, %v167
    %v170 = vrot.slane %v168, 7
    %v172 = vadd.f32 %v165, %v170
    %s173 = sld [smem:[#allocation2 + $0x88]]
    %v174 = vstv %s173
    %v175 = vmul.f32 %v40, %v174
    %v176 = vadd.f32 %v172, %v175
    %s177 = sld [smem:[#allocation2 + $0x89]]
    %v178 = vstv %s177
    %v179 = vmul.f32 %v40, %v178
    %v181 = vrot.slane %v179, 1
    %v183 = vadd.f32 %v176, %v181
    %s184 = sld [smem:[#allocation2 + $0x8a]]
    %v185 = vstv %s184
    %v186 = vmul.f32 %v40, %v185
    %v188 = vrot.slane %v186, 2
    %v190 = vadd.f32 %v183, %v188
    %s191 = sld [smem:[#allocation2 + $0x8b]]
    %v192 = vstv %s191
    %v193 = vmul.f32 %v40, %v192
    %v195 = vrot.slane %v193, 3
    %v197 = vadd.f32 %v190, %v195
    %s198 = sld [smem:[#allocation4 + $0x1]]
    %v199 = vstv %s198
    %v200 = vadd.f32 %v197, %v199
    %s201 = sld [smem:[#allocation2 + $0x100]]
    %v202 = vstv %s201
    %v203 = vmul.f32 %v39, %v202
    %s204 = sld [smem:[#allocation2 + $0x101]]
    %v205 = vstv %s204
    %v206 = vmul.f32 %v39, %v205
    %v208 = vrot.slane %v206, 1
    %v210 = vadd.f32 %v203, %v208
    %s211 = sld [smem:[#allocation2 + $0x102]]
    %v212 = vstv %s211
    %v213 = vmul.f32 %v39, %v212
    %v215 = vrot.slane %v213, 2
    %v217 = vadd.f32 %v210, %v215
    %s218 = sld [smem:[#allocation2 + $0x103]]
    %v219 = vstv %s218
    %v220 = vmul.f32 %v39, %v219
    %v222 = vrot.slane %v220, 3
    %v224 = vadd.f32 %v217, %v222
    %s225 = sld [smem:[#allocation2 + $0x104]]
    %v226 = vstv %s225
    %v227 = vmul.f32 %v39, %v226
    %v229 = vrot.slane %v227, 4
    %v231 = vadd.f32 %v224, %v229
    %s232 = sld [smem:[#allocation2 + $0x105]]
    %v233 = vstv %s232
    %v234 = vmul.f32 %v39, %v233
    %v236 = vrot.slane %v234, 5
    %v238 = vadd.f32 %v231, %v236
    %s239 = sld [smem:[#allocation2 + $0x106]]
    %v240 = vstv %s239
    %v241 = vmul.f32 %v39, %v240
    %v243 = vrot.slane %v241, 6
    %v245 = vadd.f32 %v238, %v243
    %s246 = sld [smem:[#allocation2 + $0x107]]
    %v247 = vstv %s246
    %v248 = vmul.f32 %v39, %v247
    %v250 = vrot.slane %v248, 7
    %v252 = vadd.f32 %v245, %v250
    %s253 = sld [smem:[#allocation2 + $0x108]]
    %v254 = vstv %s253
    %v255 = vmul.f32 %v40, %v254
    %v256 = vadd.f32 %v252, %v255
    %s257 = sld [smem:[#allocation2 + $0x109]]
    %v258 = vstv %s257
    %v259 = vmul.f32 %v40, %v258
    %v261 = vrot.slane %v259, 1
    %v263 = vadd.f32 %v256, %v261
    %s264 = sld [smem:[#allocation2 + $0x10a]]
    %v265 = vstv %s264
    %v266 = vmul.f32 %v40, %v265
    %v268 = vrot.slane %v266, 2
    %v270 = vadd.f32 %v263, %v268
    %s271 = sld [smem:[#allocation2 + $0x10b]]
    %v272 = vstv %s271
    %v273 = vmul.f32 %v40, %v272
    %v275 = vrot.slane %v273, 3
    %v277 = vadd.f32 %v270, %v275
    %s278 = sld [smem:[#allocation4 + $0x2]]
    %v279 = vstv %s278
    %v280 = vadd.f32 %v277, %v279
    %v282 = vrot.slane %v200, 7
    %v285 = vrot.slane %v280, 6
    %vm287 = vcmask 1040384
    %v288 = vsel %vm287, %v120, %v282
    %vm289 = vcmask 1041408
    %v290 = vsel %vm289, %v288, %v285
    %v291 = vmax.f32 %v290, 0.0
    %vm292 = vcmask 813056
    %293 = vst.msk [vmem:[%s3] sm:$0x7] %vm292, %v291
    // Predicated region
    $region22: #{tpu_custom_call.1} parent=1 // pred_check
      _
    $region23: #{tpu_custom_call.1} parent=1 // pred_check_branch
      %295 = sbr.rel (0) target = $region25
    $region24: #{tpu_custom_call.1} parent=1 // pred_region
      _
    $region25: #{tpu_custom_call.1} parent=1 // pred_fallthru
      _
    // Predicated region
    $region26: #{tpu_custom_call.1} parent=1 // pred_check
      _
    $region27: #{tpu_custom_call.1} parent=1 // pred_check_branch
      %297 = sbr.rel (0) target = $region29
    $region28: #{tpu_custom_call.1} parent=1 // pred_region
      _
    $region29: #{tpu_custom_call.1} parent=1 // pred_fallthru
      _
    %298 = vsyncpa [#allocation3], 1
    %299 = vsyncpa [#allocation5], 1

</llo_original>
